<compile_context>
chip_gen: v5e
topology: v5e:2x2
jax: 0.10.0
libtpu: 0.0.40
codegen_flags: <defaults>
</compile_context>

<pallas_src>
import functools

import jax
import jax.numpy as jnp
from jax.experimental import pallas as pl
from jax.experimental.pallas import tpu as pltpu

K_SAMPLES = 5
DROP_P = 0.5

LANE = 128
SUBLANE = 8
MAX_TILE_B = 256  # 256-aligned M tiles match the v6e/v7x 2x256 MXU (and are 128-aligned for v5e)


def _msd_kernel(x_ref, cnt_ref, w_ref, b_ref, o_ref, *, inv_k_keep):
    # x_ref:   [TB, H]  f32
    # cnt_ref: [TB, H]  int8  (per-element keep count in [0, K])
    # w_ref:   [H, Lp]  bf16  (classifier weight, transposed + lane-padded, resident)
    # b_ref:   [1, Lp]  f32   (bias, lane-padded, resident)
    # o_ref:   [TB, Lp] f32
    scale = cnt_ref[...].astype(jnp.float32) * jnp.float32(inv_k_keep)
    x_eff = (x_ref[...] * scale).astype(jnp.bfloat16)  # bf16 MXU operand
    acc = jnp.dot(x_eff, w_ref[...], preferred_element_type=jnp.float32)
    o_ref[...] = acc + b_ref[...]


def multi_sample_dropout(x, weight, bias, key, *, k_samples=K_SAMPLES, drop_p=DROP_P):
    """x: [B, H] f32; weight: [L, H] (PyTorch nn.Linear layout); bias: [L]; key: jax PRNG key."""
    B, H = x.shape
    L = weight.shape[0]
    assert 0.0 <= drop_p < 1.0, "drop_p must be in [0, 1)"

    # K independent Bernoulli(1-p) masks collapse to a per-element keep count.
    keep = jax.random.bernoulli(key, 1.0 - drop_p, (k_samples, B, H))
    counts = jnp.sum(keep, axis=0, dtype=jnp.int32).astype(jnp.int8)  # values in [0, K]

    # Lane-dense weight / bias / output: pad num_labels up to a multiple of 128.
    L_pad = max(LANE, pl.cdiv(L, LANE) * LANE)
    w_p = jnp.zeros((H, L_pad), jnp.bfloat16).at[:, :L].set(weight.T.astype(jnp.bfloat16))
    b_p = jnp.zeros((1, L_pad), jnp.float32).at[:, :L].set(bias.astype(jnp.float32))

    # Batch tiling: pad B to a sublane multiple; tile is either the whole (small) batch
    # or 256 rows (multiple of 32, so the int8 counts block is layout-friendly).
    B8 = pl.cdiv(B, SUBLANE) * SUBLANE
    if B8 <= MAX_TILE_B:
        tile_b, b_pad = B8, B8
    else:
        tile_b = MAX_TILE_B
        b_pad = pl.cdiv(B, tile_b) * tile_b

    x_p = jnp.zeros((b_pad, H), jnp.float32).at[:B, :].set(x.astype(jnp.float32))
    c_p = jnp.zeros((b_pad, H), jnp.int8).at[:B, :].set(counts)

    inv_k_keep = 1.0 / (k_samples * (1.0 - drop_p))
    kernel = functools.partial(_msd_kernel, inv_k_keep=inv_k_keep)

    out = pl.pallas_call(
        kernel,
        out_shape=jax.ShapeDtypeStruct((b_pad, L_pad), jnp.float32),
        grid=(b_pad // tile_b,),
        in_specs=[
            pl.BlockSpec((tile_b, H), lambda i: (i, 0)),   # x tile (pipelined over batch)
            pl.BlockSpec((tile_b, H), lambda i: (i, 0)),   # keep-count tile
            pl.BlockSpec((H, L_pad), lambda i: (0, 0)),    # weight: resident
            pl.BlockSpec((1, L_pad), lambda i: (0, 0)),    # bias: resident
        ],
        out_specs=pl.BlockSpec((tile_b, L_pad), lambda i: (i, 0)),
        compiler_params=pltpu.CompilerParams(
            dimension_semantics=("parallel",)  # shard batch tiles across TCs on v7x
        ),
    )(x_p, c_p, w_p, b_p)

    return out[:B, :L]


if __name__ == "__main__":
    # Small shapes implied by the module: hidden_size=32, num_labels=8, batch=8.
    batch, hidden, num_labels = 8, 32, 8

    key = jax.random.PRNGKey(0)
    kx, kw, kb, kd = jax.random.split(key, 4)

    x = jax.random.normal(kx, (batch, hidden), dtype=jnp.float32)

    # Deterministic init matching nn.Linear defaults: U(-1/sqrt(H), 1/sqrt(H)).
    bound = 1.0 / (hidden ** 0.5)
    weight = jax.random.uniform(kw, (num_labels, hidden), jnp.float32, -bound, bound)
    bias = jax.random.uniform(kb, (num_labels,), jnp.float32, -bound, bound)

    out = jax.block_until_ready(multi_sample_dropout(x, weight, bias, kd))
    assert out.shape == (batch, num_labels)
    assert bool(jnp.all(jnp.isfinite(out)))

    # Sanity 1: with dropout disabled (p=0) the kernel must equal a plain linear layer.
    # (bf16 MXU operands -> loose tolerance.)
    out_nodrop = jax.block_until_ready(
        multi_sample_dropout(x, weight, bias, kd, drop_p=0.0)
    )
    ref_lin = x @ weight.T + bias
    assert bool(jnp.allclose(out_nodrop, ref_lin, atol=3e-2, rtol=3e-2))

    # Sanity 2: kernel matches a pure-JAX multi-sample-dropout reference that uses the
    # exact same Bernoulli draws (same key / same call as the wrapper).
    keep = jax.random.bernoulli(kd, 1.0 - DROP_P, (K_SAMPLES, batch, hidden))
    dropped = keep.astype(jnp.float32) * x / (1.0 - DROP_P)          # [K, B, H]
    ref_drop = jnp.mean(jnp.einsum("kbh,lh->kbl", dropped, weight), axis=0) + bias
    assert bool(jnp.allclose(out, ref_drop, atol=3e-2, rtol=3e-2))

    print("KERNEL_OK")
</pallas_src>

<mosaic_0001>
module attributes {stable_mosaic.version = 11 : i64} {
  func.func @_msd_kernel(%arg0: i32, %arg1: memref<8x32xf32, #tpu.memory_space<vmem>>, %arg2: memref<8x32xi8, #tpu.memory_space<vmem>>, %arg3: memref<32x128xbf16, #tpu.memory_space<vmem>>, %arg4: memref<1x128xf32, #tpu.memory_space<vmem>>, %arg5: memref<8x128xf32, #tpu.memory_space<vmem>>) attributes {dimension_semantics = [#tpu.dimension_semantics<parallel>], iteration_bounds = array<i64: 1>, scalar_prefetch = 0 : i64, scratch_operands = 0 : i64, tpu.core_type = #tpu.core_type<tc>, window_params = [{transform_indices = @transform_0, window_bounds = array<i64: 8, 32>}, {transform_indices = @transform_1, window_bounds = array<i64: 8, 32>}, {pipeline_mode = #tpu.pipeline_mode<synchronous>, transform_indices = @transform_2, window_bounds = array<i64: 32, 128>}, {pipeline_mode = #tpu.pipeline_mode<synchronous>, transform_indices = @transform_3, window_bounds = array<i64: 1, 128>}, {transform_indices = @transform_4, window_bounds = array<i64: 8, 128>}]} {
    %c0 = arith.constant 0 : index
    %c0_0 = arith.constant 0 : index
    %0 = vector.load %arg2[%c0, %c0_0] : memref<8x32xi8, #tpu.memory_space<vmem>>, vector<8x32xi8>
    %1 = arith.sitofp %0 : vector<8x32xi8> to vector<8x32xf32>
    %cst = arith.constant 4.000000e-01 : f32
    %2 = vector.broadcast %cst : f32 to vector<8x32xf32>
    %3 = arith.mulf %1, %2 : vector<8x32xf32>
    %c0_1 = arith.constant 0 : index
    %c0_2 = arith.constant 0 : index
    %4 = vector.load %arg1[%c0_1, %c0_2] : memref<8x32xf32, #tpu.memory_space<vmem>>, vector<8x32xf32>
    %5 = arith.mulf %4, %3 : vector<8x32xf32>
    %6 = arith.truncf %5 : vector<8x32xf32> to vector<8x32xbf16>
    %c0_3 = arith.constant 0 : index
    %c0_4 = arith.constant 0 : index
    %7 = vector.load %arg3[%c0_3, %c0_4] : memref<32x128xbf16, #tpu.memory_space<vmem>>, vector<32x128xbf16>
    %cst_5 = arith.constant dense<0.000000e+00> : vector<8x128xf32>
    %8 = tpu.matmul %6, %7, %cst_5 {dimension_numbers = #tpu.dot_dimension_numbers<[1], [0], [0], [1], [0, 0, 1, 1], [], []>} : vector<8x32xbf16>, vector<32x128xbf16>, vector<8x128xf32> -> vector<8x128xf32>
    %c0_6 = arith.constant 0 : index
    %c0_7 = arith.constant 0 : index
    %9 = vector.load %arg4[%c0_6, %c0_7] : memref<1x128xf32, #tpu.memory_space<vmem>>, vector<1x128xf32>
    %10 = vector.broadcast %9 : vector<1x128xf32> to vector<8x128xf32>
    %11 = arith.addf %8, %10 : vector<8x128xf32>
    %c0_8 = arith.constant 0 : index
    %c0_9 = arith.constant 0 : index
    %12 = vector.load %arg5[%c0_8, %c0_9] : memref<8x128xf32, #tpu.memory_space<vmem>>, vector<8x128xf32>
    tpu.vector_store %arg5[%c0_8, %c0_9], %11 {strides = array<i32>} : memref<8x128xf32, #tpu.memory_space<vmem>>, vector<8x128xf32>,
    return
  }
  func.func @transform_0(%arg0: i32) -> (i32, i32) {
    %c0_i32 = arith.constant 0 : i32
    %c0_i32_0 = arith.constant 0 : i32
    return %arg0, %c0_i32 : i32, i32
  }
  func.func @transform_1(%arg0: i32) -> (i32, i32) {
    %c0_i32 = arith.constant 0 : i32
    %c0_i32_0 = arith.constant 0 : i32
    return %arg0, %c0_i32 : i32, i32
  }
  func.func @transform_2(%arg0: i32) -> (i32, i32) {
    %c0_i32 = arith.constant 0 : i32
    %c0_i32_0 = arith.constant 0 : i32
    %c0_i32_1 = arith.constant 0 : i32
    return %c0_i32, %c0_i32_0 : i32, i32
  }
  func.func @transform_3(%arg0: i32) -> (i32, i32) {
    %c0_i32 = arith.constant 0 : i32
    %c0_i32_0 = arith.constant 0 : i32
    %c0_i32_1 = arith.constant 0 : i32
    return %c0_i32, %c0_i32_0 : i32, i32
  }
  func.func @transform_4(%arg0: i32) -> (i32, i32) {
    %c0_i32 = arith.constant 0 : i32
    %c0_i32_0 = arith.constant 0 : i32
    return %arg0, %c0_i32 : i32, i32
  }
}

</mosaic_0001>

<llo_original>
// kernel: tpu_custom_call.1
$region0: #{tpu_custom_call.1}
  #allocation0 [shape = 'u32[]', space=smem, size = 0x4, offset = 0x4, fixed_abs, tag = 'smem constant byte address 0x4 - core index']
  #allocation1 [shape = 'u32[72,128]{1,0:T(1,128)}', space=vmem, size = 0x9000, scoped, tag = 'internal scratch']
  %s0 = inlined_call_operand.hbm [shape: f32[8,32], index: 0, kind: input, shape index: {}]
  %s1 = inlined_call_operand.hbm [shape: s8[8,32], index: 1, kind: input, shape index: {}]
  %s2 = inlined_call_operand.hbm [shape: bf16[32,128], index: 2, kind: input, shape index: {}]
  %s3 = inlined_call_operand.vmem [shape: f32[1,128], index: 3, kind: input, shape index: {}]
  %s4 = inlined_call_operand.hbm [shape: f32[8,128], index: 4, kind: output, shape index: {}]
  %s5 = sld [smem:[#allocation0]]
  $region38: #{tpu_custom_call.1} parent=0
    _
  %s7 = ssub.s32 1, %s5
  %s8 = scalar_select 0, %s7, %s5
  $region1: #{tpu_custom_call.1} parent=0
    #allocation2 [shape = 'u8[4096]{0}', space=vmem, size = 0x1000, scoped, tag = 'input window, operand 0, single buffered']
    #allocation3 [shape = 's32[1]{0}', space=sflag, size = 0x4, scoped, tag = 'scoped memory for tpu_custom_call.1']
    #allocation4 [shape = 's32[1]{0}', space=sflag, size = 0x4, scoped, tag = 'scoped memory for tpu_custom_call.1']
    #allocation5 [shape = 'u8[1024]{0}', space=vmem, size = 0x400, scoped, tag = 'input window, operand 1, single buffered']
    #allocation6 [shape = 's32[1]{0}', space=sflag, size = 0x4, scoped, tag = 'scoped memory for tpu_custom_call.1']
    #allocation7 [shape = 'u8[8192]{0}', space=vmem, size = 0x2000, scoped, tag = 'input window, operand 2, single buffered']
    #allocation8 [shape = 'u8[4096]{0}', space=vmem, size = 0x1000, scoped, tag = 'output window, operand 0, single buffered']
    %9 = vsyncpa [#allocation3], 0
    %10 = vsyncpa [#allocation6], 0
    %11 = vsyncpa [#allocation4], 0
    // Predicated region
    $region2: #{tpu_custom_call.1} parent=1 // pred_check
      _
    $region3: #{tpu_custom_call.1} parent=1 // pred_check_branch
      %13 = sbr.rel (0) target = $region5
    $region4: #{tpu_custom_call.1} parent=1 // pred_region
      %15 = vsyncadd [#allocation3], 0
      %s17 = sshll.u32 %s0, 4
      %s18 = int_to_ptr.hbm [resolvable:$true] %s17
      %s19 = sshll.u32 [#allocation2], 4
      %s20 = int_to_ptr.vmem [resolvable:$true] %s19
      %22 = dma.hbm_to_vmem [thread:$0]  %s18, 128, %s20, [#allocation3]
    $region5: #{tpu_custom_call.1} parent=1 // pred_fallthru
      _
    // Predicated region
    $region6: #{tpu_custom_call.1} parent=1 // pred_check
      _
    $region7: #{tpu_custom_call.1} parent=1 // pred_check_branch
      %24 = sbr.rel (0) target = $region9
    $region8: #{tpu_custom_call.1} parent=1 // pred_region
      %26 = vsyncadd [#allocation6], 0
      %s28 = sshll.u32 %s1, 4
      %s29 = int_to_ptr.hbm [resolvable:$true] %s28
      %s30 = sshll.u32 [#allocation5], 4
      %s31 = int_to_ptr.vmem [resolvable:$true] %s30
      %33 = dma.hbm_to_vmem [thread:$0]  %s29, 32, %s31, [#allocation6]
    $region9: #{tpu_custom_call.1} parent=1 // pred_fallthru
      _
    // Predicated region
    $region10: #{tpu_custom_call.1} parent=1 // pred_check
      _
    $region11: #{tpu_custom_call.1} parent=1 // pred_check_branch
      %35 = sbr.rel (0) target = $region13
    $region12: #{tpu_custom_call.1} parent=1 // pred_region
      %37 = vsyncadd [#allocation6], 0
      %s38 = sshll.u32 %s2, 4
      %s39 = int_to_ptr.hbm [resolvable:$true] %s38
      %s40 = sshll.u32 [#allocation7], 4
      %s41 = int_to_ptr.vmem [resolvable:$true] %s40
      %46 = dma.hbm_to_vmem [thread:$0]  %s39, 256, %s41, [#allocation6], 64, 64, 4
    $region13: #{tpu_custom_call.1} parent=1 // pred_fallthru
      _
    // Predicated region
    $region14: #{tpu_custom_call.1} parent=1 // pred_check
      _
    $region15: #{tpu_custom_call.1} parent=1 // pred_check_branch
      %48 = sbr.rel (0) target = $region17
    $region16: #{tpu_custom_call.1} parent=1 // pred_region
      _
    $region17: #{tpu_custom_call.1} parent=1 // pred_fallthru
      _
    // Predicated region
    $region18: #{tpu_custom_call.1} parent=1 // pred_check
      _
    $region19: #{tpu_custom_call.1} parent=1 // pred_check_branch
      %50 = sbr.rel (0) target = $region21
    $region20: #{tpu_custom_call.1} parent=1 // pred_region
      %52 = dma.done [#allocation3], 128
    $region21: #{tpu_custom_call.1} parent=1 // pred_fallthru
      _
    // Predicated region
    $region22: #{tpu_custom_call.1} parent=1 // pred_check
      _
    $region23: #{tpu_custom_call.1} parent=1 // pred_check_branch
      %54 = sbr.rel (0) target = $region25
    $region24: #{tpu_custom_call.1} parent=1 // pred_region
      %56 = dma.done [#allocation6], 32
    $region25: #{tpu_custom_call.1} parent=1 // pred_fallthru
      _
    // Predicated region
    $region26: #{tpu_custom_call.1} parent=1 // pred_check
      _
    $region27: #{tpu_custom_call.1} parent=1 // pred_check_branch
      %58 = sbr.rel (0) target = $region29
    $region28: #{tpu_custom_call.1} parent=1 // pred_region
      %60 = dma.done [#allocation6], 256
    $region29: #{tpu_custom_call.1} parent=1 // pred_fallthru
      _
    %v62 = vld [vmem:[#allocation5] sm:$0x3]
    %v63 = vunpack.c.0.s8 %v62
    %v64 = vcvt.s32.f32 %v63
    %v65 = vmul.f32 %v64, 0.4
    %v66 = vld [vmem:[#allocation2] sm:$0xff]
    %v67 = vmul.f32 %v66, %v65
    %v68 = vpack.c.bf16 %v67, %v67
    %v69 = vld [vmem:[#allocation7] sm:$0xf]
    %v70 = vld [vmem:[#allocation7 + $0x4] sm:$0xf]
    %v71 = vld [vmem:[#allocation7 + $0x8] sm:$0xf]
    %v72 = vld [vmem:[#allocation7 + $0xc] sm:$0xf]
    %v73 = vld [vmem:[%s3] sm:$0x1]
    %v75 = vperm.slane %v73, 0
    %v81 = vunpack.c.l.b16 %v69
    %v82 = vunpack.c.l.b16 %v70
    %v83 = vunpack.c.l.b16 %v71
    %v84 = vunpack.c.l.b16 %v72
    %v85 = vpack.c.b16 %v82, %v81
    %v86 = vpack.c.b16 %v84, %v83
    %vm89 = vcmask 261120
    %v91 = vsel %vm89, %v68, 0
    %93 = vmatpush.bf16.msra.mxu0 0
    %94 = vmatpush.bf16.msra.mxu0 0
    %95 = vmatpush.bf16.msra.mxu0 0
    %96 = vmatpush.bf16.msra.mxu0 0
    %97 = vmatpush.bf16.msra.mxu0 0
    %98 = vmatpush.bf16.msra.mxu0 0
    %99 = vmatpush.bf16.msra.mxu0 %v86
    %100 = vmatpush.bf16.msra.mxu0 %v85
    %101 = vmatmul.bf16.gmra.mxu0 %v91
    %v102 = vpop.f32.mrf.mxu0
    %v103 = vadd.f32 %v75, %v102
    %v104 = vpop.f32.mrf.mxu0
    %105 = vdwg.mxu0
    %106 = vst [vmem:[#allocation8] sm:$0xff] %v103
    // Predicated region
    $region30: #{tpu_custom_call.1} parent=1 // pred_check
      _
    $region31: #{tpu_custom_call.1} parent=1 // pred_check_branch
      %108 = sbr.rel (0) target = $region33
    $region32: #{tpu_custom_call.1} parent=1 // pred_region
      %110 = vsyncadd [#allocation4], 0
      %s112 = sshll.u32 [#allocation8], 4
      %s113 = int_to_ptr.vmem [resolvable:$true] %s112
      %s114 = sshll.u32 %s4, 4
      %s115 = int_to_ptr.hbm [resolvable:$true] %s114
      %117 = dma.vmem_to_hbm [thread:$0]  %s113, 128, %s115, [#allocation4]
    $region33: #{tpu_custom_call.1} parent=1 // pred_fallthru
      _
    // Predicated region
    $region34: #{tpu_custom_call.1} parent=1 // pred_check
      _
    $region35: #{tpu_custom_call.1} parent=1 // pred_check_branch
      %119 = sbr.rel (0) target = $region37
    $region36: #{tpu_custom_call.1} parent=1 // pred_region
      %121 = dma.done [#allocation4], 128
    $region37: #{tpu_custom_call.1} parent=1 // pred_fallthru
      _
    %122 = vsyncpa [#allocation3], 1
    %123 = vsyncpa [#allocation6], 1
    %124 = vsyncpa [#allocation4], 1

</llo_original>
